<compile_context>
chip_gen: v7x
topology: tpu7x:2x2x1
jax: 0.10.0
libtpu: 0.0.40
codegen_flags: <defaults>
</compile_context>

<pallas_src>
import functools
import numpy as np
import jax
import jax.numpy as jnp
from jax.experimental import pallas as pl
from jax.experimental.pallas import tpu as pltpu


# ---------------------------------------------------------------------------
# Deterministic "parameter" construction (window, DFT basis, mel filterbank).
# ---------------------------------------------------------------------------
def hann_window_periodic(n: int) -> np.ndarray:
    # torch.hann_window default: periodic=True
    k = np.arange(n, dtype=np.float64)
    return 0.5 * (1.0 - np.cos(2.0 * np.pi * k / n))


def dft_matrices(n_fft: int):
    # X[k] = sum_n x[n] * exp(-2*pi*i*k*n/n_fft); only power is used downstream.
    n_freq = n_fft // 2 + 1
    n = np.arange(n_fft, dtype=np.float64)[:, None]
    k = np.arange(n_freq, dtype=np.float64)[None, :]
    ang = 2.0 * np.pi * n * k / n_fft
    cos_m = np.cos(ang)            # (n_fft, n_freq)
    sin_m = -np.sin(ang)           # (n_fft, n_freq)
    return cos_m, sin_m


def melscale_fbanks(n_freqs: int, f_min: float, f_max: float, n_mels: int,
                    sample_rate: int) -> np.ndarray:
    # torchaudio.functional.melscale_fbanks, mel_scale='htk', norm=None
    def hz_to_mel(f):
        return 2595.0 * np.log10(1.0 + f / 700.0)

    def mel_to_hz(m):
        return 700.0 * (10.0 ** (m / 2595.0) - 1.0)

    all_freqs = np.linspace(0.0, sample_rate / 2.0, n_freqs)
    m_pts = np.linspace(hz_to_mel(f_min), hz_to_mel(f_max), n_mels + 2)
    f_pts = mel_to_hz(m_pts)
    f_diff = f_pts[1:] - f_pts[:-1]                              # (n_mels+1,)
    slopes = f_pts[None, :] - all_freqs[:, None]                 # (n_freqs, n_mels+2)
    down = -slopes[:, :-2] / f_diff[:-1]
    up = slopes[:, 2:] / f_diff[1:]
    fb = np.maximum(0.0, np.minimum(down, up))                   # (n_freqs, n_mels)
    return fb


def _round_up(x: int, m: int) -> int:
    return ((x + m - 1) // m) * m


# ---------------------------------------------------------------------------
# Pallas kernel: fused (windowed DFT) -> power -> mel -> dB, one row-tile per step.
# ---------------------------------------------------------------------------
def _logmel_kernel(frames_ref, c_ref, fb2_ref, out_ref, *, dft_precision):
    # frames_ref: (TILE, n_fft)             [bf16 or f32]
    # c_ref:      (n_fft, 2*F_PAD)          window-folded [cos | sin] basis
    # fb2_ref:    (2*F_PAD, M_PAD)          stacked/padded mel filterbank
    # out_ref:    (TILE, M_PAD)             lane-dense dB output
    y = jnp.dot(frames_ref[...], c_ref[...],
                preferred_element_type=jnp.float32,
                precision=dft_precision)                 # (TILE, 2*F_PAD) = [re | im]
    p2 = y * y                                           # [re^2 | im^2]
    mel = jnp.dot(p2, fb2_ref[...],
                  preferred_element_type=jnp.float32)    # == (re^2+im^2) @ fb
    # AmplitudeToDB(stype='power', top_db=None), ref=1.0, amin=1e-10
    out_ref[...] = 10.0 * jnp.log10(jnp.maximum(mel, 1e-10))


# ---------------------------------------------------------------------------
# Module wrapper.
# ---------------------------------------------------------------------------
class GPUTransformNeuralfpPallas:
    """Train-branch (cpu=False) forward: returns (logmelspec(x_i), logmelspec(x_j))."""

    def __init__(self, cfg, train=True, use_bf16=True, frame_tile=256):
        self.cfg = cfg
        self.train = train
        self.n_fft = int(cfg["n_fft"])
        self.win_len = int(cfg["win_len"])
        self.hop_len = int(cfg["hop_len"])
        self.n_mels = int(cfg["n_mels"])
        self.fs = int(cfg["fs"])
        self.frame_tile = int(frame_tile)
        assert self.win_len <= self.n_fft

        n_fft, n_freq = self.n_fft, self.n_fft // 2 + 1
        self.f_pad = _round_up(n_freq, 64)        # each of re/im halves -> width mult of 128
        self.m_pad = _round_up(self.n_mels, 128)  # lane-dense output width

        # --- window (torch.stft pads win_len-window centered to n_fft) ---
        win = hann_window_periodic(self.win_len)
        lpad = (n_fft - self.win_len) // 2
        win_full = np.zeros(n_fft, dtype=np.float64)
        win_full[lpad:lpad + self.win_len] = win

        # --- window-folded, lane-padded, fused [cos | sin] DFT basis ---
        cos_m, sin_m = dft_matrices(n_fft)                       # (n_fft, n_freq)
        c = np.zeros((n_fft, 2 * self.f_pad), dtype=np.float64)
        c[:, :n_freq] = win_full[:, None] * cos_m
        c[:, self.f_pad:self.f_pad + n_freq] = win_full[:, None] * sin_m

        # --- stacked / padded mel filterbank: (2*F_PAD, M_PAD) ---
        fb = melscale_fbanks(n_freq, 0.0, self.fs / 2.0, self.n_mels, self.fs)
        fb_pad = np.zeros((self.f_pad, self.m_pad), dtype=np.float64)
        fb_pad[:n_freq, :self.n_mels] = fb
        fb2 = np.vstack([fb_pad, fb_pad])

        self.dft_dtype = jnp.bfloat16 if use_bf16 else jnp.float32
        self.dft_precision = None if use_bf16 else jax.lax.Precision.HIGHEST
        self.c_mat = jnp.asarray(c.astype(np.float32)).astype(self.dft_dtype)
        self.fb2 = jnp.asarray(fb2.astype(np.float32))

        self._forward = jax.jit(self._forward_impl)

    # -- framing: center=True, pad_mode='reflect'; no XLA gather when hop | n_fft --
    def _frame(self, x):
        n_fft, hop = self.n_fft, self.hop_len
        B, L = x.shape
        pad = n_fft // 2
        xp = jnp.pad(x, ((0, 0), (pad, pad)), mode="reflect")   # (B, L + n_fft)
        NF = 1 + L // hop
        if n_fft % hop == 0:
            r = n_fft // hop
            M = NF - 1 + r
            blocks = xp[:, :M * hop].reshape(B, M, hop)
            frames = jnp.concatenate([blocks[:, i:i + NF] for i in range(r)], axis=-1)
        else:
            idx = np.arange(NF)[:, None] * hop + np.arange(n_fft)[None, :]
            frames = xp[:, idx]
        return frames, NF                                        # (B, NF, n_fft)

    def _forward_impl(self, x_i, x_j):
        B, L = x_i.shape
        x_all = jnp.concatenate([x_i, x_j], axis=0)              # (2B, L): one kernel launch
        frames, NF = self._frame(x_all)                          # (2B, NF, n_fft)
        rows = 2 * B * NF
        frames = frames.reshape(rows, self.n_fft).astype(self.dft_dtype)

        tile = self.frame_tile
        rows_pad = _round_up(rows, tile)
        if rows_pad != rows:
            frames = jnp.pad(frames, ((0, rows_pad - rows), (0, 0)))

        grid = pl.cdiv(rows_pad, tile)
        kernel = functools.partial(_logmel_kernel, dft_precision=self.dft_precision)
        out = pl.pallas_call(
            kernel,
            out_shape=jax.ShapeDtypeStruct((rows_pad, self.m_pad), jnp.float32),
            grid=(grid,),
            in_specs=[
                pl.BlockSpec((tile, self.n_fft), lambda r: (r, 0)),
                pl.BlockSpec(self.c_mat.shape, lambda r: (0, 0)),
                pl.BlockSpec(self.fb2.shape, lambda r: (0, 0)),
            ],
            out_specs=pl.BlockSpec((tile, self.m_pad), lambda r: (r, 0)),
            compiler_params=pltpu.CompilerParams(
                dimension_semantics=("parallel",)),
        )(frames, self.c_mat, self.fb2)

        # strip padding, restore torchaudio MelSpectrogram layout (batch, n_mels, time);
        # the slice + transpose fuse under jit.
        out = out[:rows, :self.n_mels].reshape(2 * B, NF, self.n_mels)
        out = jnp.transpose(out, (0, 2, 1))                      # (2B, n_mels, NF)
        return out[:B], out[B:]

    def __call__(self, x_i, x_j):
        # TODO(synk): cpu/val branches (audiomentations transforms + unfold) not implemented.
        return self._forward(x_i, x_j)


if __name__ == "__main__":
    cfg = dict(fs=8000, win_len=64, hop_len=32, n_fft=64, n_mels=32,
               n_frames=8, overlap=0.5, dur=1.0,
               ir_prob=0.5, noise_prob=0.5, tr_snr=[0, 10], val_snr=[0, 10],
               time_mask=8, freq_mask=8, arch="grafp")

    B, L = 2, 1024
    key = jax.random.PRNGKey(0)
    k_i, k_j = jax.random.split(key)
    x_i = jax.random.normal(k_i, (B, L), dtype=jnp.float32)
    x_j = jax.random.normal(k_j, (B, L), dtype=jnp.float32)

    model = GPUTransformNeuralfpPallas(cfg, train=True)
    X_i, X_j = model(x_i, x_j)
    jax.block_until_ready((X_i, X_j))

    NF = 1 + L // cfg["hop_len"]
    assert X_i.shape == (B, cfg["n_mels"], NF), X_i.shape
    assert X_j.shape == (B, cfg["n_mels"], NF), X_j.shape
    assert bool(jnp.all(jnp.isfinite(X_i))) and bool(jnp.all(jnp.isfinite(X_j)))
    print("KERNEL_OK")
</pallas_src>

<mosaic_0001>
module attributes {stable_mosaic.version = 11 : i64} {
  func.func @_logmel_kernel(%arg0: i32, %arg1: memref<256x64xbf16, #tpu.memory_space<vmem>>, %arg2: memref<64x128xbf16, #tpu.memory_space<vmem>>, %arg3: memref<128x128xf32, #tpu.memory_space<vmem>>, %arg4: memref<256x128xf32, #tpu.memory_space<vmem>>) attributes {dimension_semantics = [#tpu.dimension_semantics<parallel>], iteration_bounds = array<i64: 1>, scalar_prefetch = 0 : i64, scratch_operands = 0 : i64, tpu.core_type = #tpu.core_type<tc>, window_params = [{transform_indices = @transform_0, window_bounds = array<i64: 256, 64>}, {pipeline_mode = #tpu.pipeline_mode<synchronous>, transform_indices = @transform_1, window_bounds = array<i64: 64, 128>}, {pipeline_mode = #tpu.pipeline_mode<synchronous>, transform_indices = @transform_2, window_bounds = array<i64: 128, 128>}, {transform_indices = @transform_3, window_bounds = array<i64: 256, 128>}]} {
    %c0 = arith.constant 0 : index
    %c0_0 = arith.constant 0 : index
    %0 = vector.load %arg1[%c0, %c0_0] : memref<256x64xbf16, #tpu.memory_space<vmem>>, vector<256x64xbf16>
    %c0_1 = arith.constant 0 : index
    %c0_2 = arith.constant 0 : index
    %1 = vector.load %arg2[%c0_1, %c0_2] : memref<64x128xbf16, #tpu.memory_space<vmem>>, vector<64x128xbf16>
    %cst = arith.constant dense<0.000000e+00> : vector<256x128xf32>
    %2 = tpu.matmul %0, %1, %cst {dimension_numbers = #tpu.dot_dimension_numbers<[1], [0], [0], [1], [0, 0, 1, 1], [], []>} : vector<256x64xbf16>, vector<64x128xbf16>, vector<256x128xf32> -> vector<256x128xf32>
    %3 = arith.mulf %2, %2 : vector<256x128xf32>
    %c0_3 = arith.constant 0 : index
    %c0_4 = arith.constant 0 : index
    %4 = vector.load %arg3[%c0_3, %c0_4] : memref<128x128xf32, #tpu.memory_space<vmem>>, vector<128x128xf32>
    %cst_5 = arith.constant dense<0.000000e+00> : vector<256x128xf32>
    %5 = tpu.matmul %3, %4, %cst_5 {dimension_numbers = #tpu.dot_dimension_numbers<[1], [0], [0], [1], [0, 0, 1, 1], [], []>} : vector<256x128xf32>, vector<128x128xf32>, vector<256x128xf32> -> vector<256x128xf32>
    %cst_6 = arith.constant 1.000000e-10 : f32
    %6 = vector.broadcast %cst_6 : f32 to vector<256x128xf32>
    %7 = arith.maximumf %5, %6 : vector<256x128xf32>
    %8 = math.log %7 : vector<256x128xf32>
    %cst_7 = arith.constant 0.434294492 : f32
    %9 = vector.broadcast %cst_7 : f32 to vector<256x128xf32>
    %10 = arith.mulf %8, %9 : vector<256x128xf32>
    %cst_8 = arith.constant 1.000000e+01 : f32
    %11 = vector.broadcast %cst_8 : f32 to vector<256x128xf32>
    %12 = arith.mulf %11, %10 : vector<256x128xf32>
    %c0_9 = arith.constant 0 : index
    %c0_10 = arith.constant 0 : index
    %13 = vector.load %arg4[%c0_9, %c0_10] : memref<256x128xf32, #tpu.memory_space<vmem>>, vector<256x128xf32>
    tpu.vector_store %arg4[%c0_9, %c0_10], %12 {strides = array<i32>} : memref<256x128xf32, #tpu.memory_space<vmem>>, vector<256x128xf32>,
    return
  }
  func.func @transform_0(%arg0: i32) -> (i32, i32) {
    %c0_i32 = arith.constant 0 : i32
    %c0_i32_0 = arith.constant 0 : i32
    return %arg0, %c0_i32 : i32, i32
  }
  func.func @transform_1(%arg0: i32) -> (i32, i32) {
    %c0_i32 = arith.constant 0 : i32
    %c0_i32_0 = arith.constant 0 : i32
    %c0_i32_1 = arith.constant 0 : i32
    return %c0_i32, %c0_i32_0 : i32, i32
  }
  func.func @transform_2(%arg0: i32) -> (i32, i32) {
    %c0_i32 = arith.constant 0 : i32
    %c0_i32_0 = arith.constant 0 : i32
    %c0_i32_1 = arith.constant 0 : i32
    return %c0_i32, %c0_i32_0 : i32, i32
  }
  func.func @transform_3(%arg0: i32) -> (i32, i32) {
    %c0_i32 = arith.constant 0 : i32
    %c0_i32_0 = arith.constant 0 : i32
    return %arg0, %c0_i32 : i32, i32
  }
}

</mosaic_0001>

<llo_original>
// kernel: _forward_impl.1
$region0: #{_forward_impl.1}
  #allocation0 [shape = 'u32[]', space=smem, size = 0x4, offset = 0x4, fixed_abs, tag = 'smem constant byte address 0x4 - core index']
  #allocation1 [shape = 'u32[144,128]{1,0:T(1,128)}', space=vmem, size = 0x12000, scoped, tag = 'internal scratch']
  %s0 = inlined_call_operand.vmem [shape: bf16[256,64], index: 0, kind: input, shape index: {}]
  %s1 = inlined_call_operand.vmem [shape: bf16[64,128], index: 1, kind: input, shape index: {}]
  %s2 = inlined_call_operand.vmem [shape: f32[128,128], index: 2, kind: input, shape index: {}]
  %s3 = inlined_call_operand.vmem [shape: f32[256,128], index: 3, kind: output, shape index: {}]
  %s4 = sld [smem:[#allocation0]]
  $region22: #{_forward_impl.1} parent=0
    _
  %s6 = ssub.s32 1, %s4
  %s7 = scalar_select 0, %s6, %s4
  // Predicated region
  $region2: #{_forward_impl.1} parent=0 // pred_check
    _
  $region3: #{_forward_impl.1} parent=0 // pred_check_branch
    %9 = sbr.rel (0) target = $region5
  $region4: #{_forward_impl.1} parent=0 // pred_region
    _
  $region5: #{_forward_impl.1} parent=0 // pred_fallthru
    _
  // Predicated region
  $region6: #{_forward_impl.1} parent=0 // pred_check
    _
  $region7: #{_forward_impl.1} parent=0 // pred_check_branch
    %11 = sbr.rel (0) target = $region9
  $region8: #{_forward_impl.1} parent=0 // pred_region
    _
  $region9: #{_forward_impl.1} parent=0 // pred_fallthru
    _
  // Predicated region
  $region10: #{_forward_impl.1} parent=0 // pred_check
    _
  $region11: #{_forward_impl.1} parent=0 // pred_check_branch
    %13 = sbr.rel (0) target = $region13
  $region12: #{_forward_impl.1} parent=0 // pred_region
    _
  $region13: #{_forward_impl.1} parent=0 // pred_fallthru
    _
  %v15 = vld [vmem:[%s0] sm:$0xf]
  %v16 = vld [vmem:[%s0 + $0x4] sm:$0xf]
  %v17 = vld [vmem:[%s0 + $0x8] sm:$0xf]
  %v18 = vld [vmem:[%s0 + $0xc] sm:$0xf]
  %v19 = vld [vmem:[%s0 + $0x10] sm:$0xf]
  %v20 = vld [vmem:[%s0 + $0x14] sm:$0xf]
  %v21 = vld [vmem:[%s0 + $0x18] sm:$0xf]
  %v22 = vld [vmem:[%s0 + $0x1c] sm:$0xf]
  %v23 = vld [vmem:[%s0 + $0x20] sm:$0xf]
  %v24 = vld [vmem:[%s0 + $0x24] sm:$0xf]
  %v25 = vld [vmem:[%s0 + $0x28] sm:$0xf]
  %v26 = vld [vmem:[%s0 + $0x2c] sm:$0xf]
  %v27 = vld [vmem:[%s0 + $0x30] sm:$0xf]
  %v28 = vld [vmem:[%s0 + $0x34] sm:$0xf]
  %v29 = vld [vmem:[%s0 + $0x38] sm:$0xf]
  %v30 = vld [vmem:[%s0 + $0x3c] sm:$0xf]
  %v31 = vld [vmem:[%s0 + $0x40] sm:$0xf]
  %v32 = vld [vmem:[%s0 + $0x44] sm:$0xf]
  %v33 = vld [vmem:[%s0 + $0x48] sm:$0xf]
  %v34 = vld [vmem:[%s0 + $0x4c] sm:$0xf]
  %v35 = vld [vmem:[%s0 + $0x50] sm:$0xf]
  %v36 = vld [vmem:[%s0 + $0x54] sm:$0xf]
  %v37 = vld [vmem:[%s0 + $0x58] sm:$0xf]
  %v38 = vld [vmem:[%s0 + $0x5c] sm:$0xf]
  %v39 = vld [vmem:[%s0 + $0x60] sm:$0xf]
  %v40 = vld [vmem:[%s0 + $0x64] sm:$0xf]
  %v41 = vld [vmem:[%s0 + $0x68] sm:$0xf]
  %v42 = vld [vmem:[%s0 + $0x6c] sm:$0xf]
  %v43 = vld [vmem:[%s0 + $0x70] sm:$0xf]
  %v44 = vld [vmem:[%s0 + $0x74] sm:$0xf]
  %v45 = vld [vmem:[%s0 + $0x78] sm:$0xf]
  %v46 = vld [vmem:[%s0 + $0x7c] sm:$0xf]
  %v47 = vld [vmem:[%s1] sm:$0xf]
  %v48 = vld [vmem:[%s1 + $0x4] sm:$0xf]
  %v49 = vld [vmem:[%s1 + $0x8] sm:$0xf]
  %v50 = vld [vmem:[%s1 + $0xc] sm:$0xf]
  %v51 = vld [vmem:[%s1 + $0x10] sm:$0xf]
  %v52 = vld [vmem:[%s1 + $0x14] sm:$0xf]
  %v53 = vld [vmem:[%s1 + $0x18] sm:$0xf]
  %v54 = vld [vmem:[%s1 + $0x1c] sm:$0xf]
  %v87 = vunpack.c.l.b16 %v15
  %v88 = vunpack.c.l.b16 %v16
  %v89 = vunpack.c.l.b16 %v17
  %v90 = vunpack.c.l.b16 %v18
  %v91 = vunpack.c.l.b16 %v19
  %v92 = vunpack.c.l.b16 %v20
  %v93 = vunpack.c.l.b16 %v21
  %v94 = vunpack.c.l.b16 %v22
  %v95 = vunpack.c.l.b16 %v23
  %v96 = vunpack.c.l.b16 %v24
  %v97 = vunpack.c.l.b16 %v25
  %v98 = vunpack.c.l.b16 %v26
  %v99 = vunpack.c.l.b16 %v27
  %v100 = vunpack.c.l.b16 %v28
  %v101 = vunpack.c.l.b16 %v29
  %v102 = vunpack.c.l.b16 %v30
  %v103 = vunpack.c.l.b16 %v31
  %v104 = vunpack.c.l.b16 %v32
  %v105 = vunpack.c.l.b16 %v33
  %v106 = vunpack.c.l.b16 %v34
  %v107 = vunpack.c.l.b16 %v35
  %v108 = vunpack.c.l.b16 %v36
  %v109 = vunpack.c.l.b16 %v37
  %v110 = vunpack.c.l.b16 %v38
  %v111 = vunpack.c.l.b16 %v39
  %v112 = vunpack.c.l.b16 %v40
  %v113 = vunpack.c.l.b16 %v41
  %v114 = vunpack.c.l.b16 %v42
  %v115 = vunpack.c.l.b16 %v43
  %v116 = vunpack.c.l.b16 %v44
  %v117 = vunpack.c.l.b16 %v45
  %v118 = vunpack.c.l.b16 %v46
  %v119 = vpack.c.b16 %v88, %v87
  %v120 = vpack.c.b16 %v90, %v89
  %v121 = vpack.c.b16 %v92, %v91
  %v122 = vpack.c.b16 %v94, %v93
  %v123 = vpack.c.b16 %v96, %v95
  %v124 = vpack.c.b16 %v98, %v97
  %v125 = vpack.c.b16 %v100, %v99
  %v126 = vpack.c.b16 %v102, %v101
  %v127 = vpack.c.b16 %v104, %v103
  %v128 = vpack.c.b16 %v106, %v105
  %v129 = vpack.c.b16 %v108, %v107
  %v130 = vpack.c.b16 %v110, %v109
  %v131 = vpack.c.b16 %v112, %v111
  %v132 = vpack.c.b16 %v114, %v113
  %v133 = vpack.c.b16 %v116, %v115
  %v134 = vpack.c.b16 %v118, %v117
  %v143 = vunpack.c.l.b16 %v47
  %v144 = vunpack.c.l.b16 %v48
  %v145 = vunpack.c.l.b16 %v49
  %v146 = vunpack.c.l.b16 %v50
  %v147 = vunpack.c.l.b16 %v51
  %v148 = vunpack.c.l.b16 %v52
  %v149 = vunpack.c.l.b16 %v53
  %v150 = vunpack.c.l.b16 %v54
  %v151 = vpack.c.b16 %v144, %v143
  %v152 = vpack.c.b16 %v146, %v145
  %v153 = vpack.c.b16 %v148, %v147
  %v154 = vpack.c.b16 %v150, %v149
  %vm159 = vcmask 523264
  %v161 = vsel %vm159, %v119, 0
  %v164 = vsel %vm159, %v120, 0
  %v167 = vsel %vm159, %v121, 0
  %v170 = vsel %vm159, %v122, 0
  %v173 = vsel %vm159, %v123, 0
  %v176 = vsel %vm159, %v124, 0
  %v179 = vsel %vm159, %v125, 0
  %v182 = vsel %vm159, %v126, 0
  %v185 = vsel %vm159, %v127, 0
  %v188 = vsel %vm159, %v128, 0
  %v191 = vsel %vm159, %v129, 0
  %v194 = vsel %vm159, %v130, 0
  %v197 = vsel %vm159, %v131, 0
  %v200 = vsel %vm159, %v132, 0
  %v203 = vsel %vm159, %v133, 0
  %v206 = vsel %vm159, %v134, 0
  %208 = vmatprep.subr.bf16.mxu0 0
  %209 = vmatpush1.bf16.msra.mxu0 %v151
  %210 = vmatprep.subr.bf16.mxu0 0
  %211 = vmatpush1.bf16.msra.mxu0 %v152
  %212 = vmatprep.subr.bf16.mxu0 0
  %213 = vmatpush1.bf16.msra.mxu0 %v153
  %214 = vmatprep.subr.bf16.mxu0 0
  %215 = vmatpush1.bf16.msra.mxu0 %v154
  %216 = vmatprep.subr.bf16.mxu0 0
  %217 = vmatpush1.bf16.msra.mxu0 0
  %218 = vmatprep.subr.bf16.mxu0 0
  %219 = vmatpush1.bf16.msra.mxu0 0
  %220 = vmatprep.subr.bf16.mxu0 0
  %221 = vmatpush1.bf16.msra.mxu0 0
  %222 = vmatprep.subr.bf16.mxu0 0
  %223 = vmatpush1.bf16.msra.mxu0 0
  %224 = vmatprep.subr.bf16.mxu0 0
  %225 = vmatpush1.bf16.msra.mxu0 0
  %226 = vmatprep.subr.bf16.mxu0 0
  %227 = vmatpush1.bf16.msra.mxu0 0
  %228 = vmatprep.subr.bf16.mxu0 0
  %229 = vmatpush1.bf16.msra.mxu0 0
  %230 = vmatprep.subr.bf16.mxu0 0
  %231 = vmatpush1.bf16.msra.mxu0 0
  %232 = vmatprep.subr.bf16.mxu0 0
  %233 = vmatpush1.bf16.msra.mxu0 0
  %234 = vmatprep.subr.bf16.mxu0 0
  %235 = vmatpush1.bf16.msra.mxu0 0
  %236 = vmatprep.subr.bf16.mxu0 0
  %237 = vmatpush1.bf16.msra.mxu0 0
  %238 = vmatprep.subr.bf16.mxu0 0
  %239 = vmatpush1.bf16.msra.mxu0 0
  %240 = vmatprep.mubr.bf16.mxu0 0
  %241 = vmatmul.mubr.bf16.gmra.mrb[0].mxu0 %v161
  %v242 = vpop.f32.mrb[0].mxu0
  %v243 = vadd.f32 0.0, %v242
  %v244 = vpop.f32.mrb[0].mxu0
  %v245 = vpop.f32.mrb[0].mxu0
  %v246 = vadd.f32 0.0, %v245
  %v247 = vpop.f32.mrb[0].mxu0
  %248 = vmatprep.mubr.bf16.mxu0 0
  %249 = vmatmul.mubr.bf16.gmra.mrb[0].mxu0 %v164
  %v250 = vpop.f32.mrb[0].mxu0
  %v251 = vadd.f32 0.0, %v250
  %v252 = vpop.f32.mrb[0].mxu0
  %v253 = vpop.f32.mrb[0].mxu0
  %v254 = vadd.f32 0.0, %v253
  %v255 = vpop.f32.mrb[0].mxu0
  %256 = vmatprep.mubr.bf16.mxu0 0
  %257 = vmatmul.mubr.bf16.gmra.mrb[0].mxu0 %v167
  %v258 = vpop.f32.mrb[0].mxu0
  %v259 = vadd.f32 0.0, %v258
  %v260 = vpop.f32.mrb[0].mxu0
  %v261 = vpop.f32.mrb[0].mxu0
  %v262 = vadd.f32 0.0, %v261
  %v263 = vpop.f32.mrb[0].mxu0
  %264 = vmatprep.mubr.bf16.mxu0 0
  %265 = vmatmul.mubr.bf16.gmra.mrb[0].mxu0 %v170
  %v266 = vpop.f32.mrb[0].mxu0
  %v267 = vadd.f32 0.0, %v266
  %v268 = vpop.f32.mrb[0].mxu0
  %v269 = vpop.f32.mrb[0].mxu0
  %v270 = vadd.f32 0.0, %v269
  %v271 = vpop.f32.mrb[0].mxu0
  %272 = vmatprep.mubr.bf16.mxu0 0
  %273 = vmatmul.mubr.bf16.gmra.mrb[0].mxu0 %v173
  %v274 = vpop.f32.mrb[0].mxu0
  %v275 = vadd.f32 0.0, %v274
  %v276 = vpop.f32.mrb[0].mxu0
  %v277 = vpop.f32.mrb[0].mxu0
  %v278 = vadd.f32 0.0, %v277
  %v279 = vpop.f32.mrb[0].mxu0
  %280 = vmatprep.mubr.bf16.mxu0 0
  %281 = vmatmul.mubr.bf16.gmra.mrb[0].mxu0 %v176
  %v282 = vpop.f32.mrb[0].mxu0
  %v283 = vadd.f32 0.0, %v282
  %v284 = vpop.f32.mrb[0].mxu0
  %v285 = vpop.f32.mrb[0].mxu0
  %v286 = vadd.f32 0.0, %v285
  %v287 = vpop.f32.mrb[0].mxu0
  %288 = vmatprep.mubr.bf16.mxu0 0
  %289 = vmatmul.mubr.bf16.gmra.mrb[0].mxu0 %v179
  %v290 = vpop.f32.mrb[0].mxu0
  %v291 = vadd.f32 0.0, %v290
  %v292 = vpop.f32.mrb[0].mxu0
  %v293 = vpop.f32.mrb[0].mxu0
  %v294 = vadd.f32 0.0, %v293
  %v295 = vpop.f32.mrb[0].mxu0
  %296 = vmatprep.mubr.bf16.mxu0 0
  %297 = vmatmul.mubr.bf16.gmra.mrb[0].mxu0 %v182
  %v298 = vpop.f32.mrb[0].mxu0
  %v299 = vadd.f32 0.0, %v298
  %v300 = vpop.f32.mrb[0].mxu0
  %v301 = vpop.f32.mrb[0].mxu0
  %v302 = vadd.f32 0.0, %v301
  %v303 = vpop.f32.mrb[0].mxu0
  %304 = vmatprep.mubr.bf16.mxu0 0
  %305 = vmatmul.mubr.bf16.gmra.mrb[0].mxu0 %v185
  %v306 = vpop.f32.mrb[0].mxu0
  %v307 = vadd.f32 0.0, %v306
  %v308 = vpop.f32.mrb[0].mxu0
  %v309 = vpop.f32.mrb[0].mxu0
  %v310 = vadd.f32 0.0, %v309
  %v311 = vpop.f32.mrb[0].mxu0
  %312 = vmatprep.mubr.bf16.mxu0 0
  %313 = vmatmul.mubr.bf16.gmra.mrb[0].mxu0 %v188
  %v314 = vpop.f32.mrb[0].mxu0
  %v315 = vadd.f32 0.0, %v314
  %v316 = vpop.f32.mrb[0].mxu0
  %v317 = vpop.f32.mrb[0].mxu0
  %v318 = vadd.f32 0.0, %v317
  %v319 = vpop.f32.mrb[0].mxu0
  %320 = vmatprep.mubr.bf16.mxu0 0
  %321 = vmatmul.mubr.bf16.gmra.mrb[0].mxu0 %v191
  %v322 = vpop.f32.mrb[0].mxu0
  %v323 = vadd.f32 0.0, %v322
  %v324 = vpop.f32.mrb[0].mxu0
  %v325 = vpop.f32.mrb[0].mxu0
  %v326 = vadd.f32 0.0, %v325
  %v327 = vpop.f32.mrb[0].mxu0
  %328 = vmatprep.mubr.bf16.mxu0 0
  %329 = vmatmul.mubr.bf16.gmra.mrb[0].mxu0 %v194
  %v330 = vpop.f32.mrb[0].mxu0
  %v331 = vadd.f32 0.0, %v330
  %v332 = vpop.f32.mrb[0].mxu0
  %v333 = vpop.f32.mrb[0].mxu0
  %v334 = vadd.f32 0.0, %v333
  %v335 = vpop.f32.mrb[0].mxu0
  %336 = vmatprep.mubr.bf16.mxu0 0
  %337 = vmatmul.mubr.bf16.gmra.mrb[0].mxu0 %v197
  %v338 = vpop.f32.mrb[0].mxu0
  %v339 = vadd.f32 0.0, %v338
  %v340 = vpop.f32.mrb[0].mxu0
  %v341 = vpop.f32.mrb[0].mxu0
  %v342 = vadd.f32 0.0, %v341
  %v343 = vpop.f32.mrb[0].mxu0
  %344 = vmatprep.mubr.bf16.mxu0 0
  %345 = vmatmul.mubr.bf16.gmra.mrb[0].mxu0 %v200
  %v346 = vpop.f32.mrb[0].mxu0
  %v347 = vadd.f32 0.0, %v346
  %v348 = vpop.f32.mrb[0].mxu0
  %v349 = vpop.f32.mrb[0].mxu0
  %v350 = vadd.f32 0.0, %v349
  %v351 = vpop.f32.mrb[0].mxu0
  %352 = vmatprep.mubr.bf16.mxu0 0
  %353 = vmatmul.mubr.bf16.gmra.mrb[0].mxu0 %v203
  %v354 = vpop.f32.mrb[0].mxu0
  %v355 = vadd.f32 0.0, %v354
  %v356 = vpop.f32.mrb[0].mxu0
  %v357 = vpop.f32.mrb[0].mxu0
  %v358 = vadd.f32 0.0, %v357
  %v359 = vpop.f32.mrb[0].mxu0
  %360 = vmatprep.mubr.bf16.mxu0 0
  %361 = vmatmul.mubr.bf16.gmra.mrb[0].mxu0 %v206
  %v362 = vpop.f32.mrb[0].mxu0
  %v363 = vadd.f32 0.0, %v362
  %v364 = vpop.f32.mrb[0].mxu0
  %v365 = vpop.f32.mrb[0].mxu0
  %v366 = vadd.f32 0.0, %v365
  %v367 = vpop.f32.mrb[0].mxu0
  %368 = vdwg.mxu0
  %v369 = vmul.f32 %v243, %v243
  %v370 = vmul.f32 %v246, %v246
  %v371 = vmul.f32 %v251, %v251
  %v372 = vmul.f32 %v254, %v254
  %v373 = vmul.f32 %v259, %v259
  %v374 = vmul.f32 %v262, %v262
  %v375 = vmul.f32 %v267, %v267
  %v376 = vmul.f32 %v270, %v270
  %v377 = vmul.f32 %v275, %v275
  %v378 = vmul.f32 %v278, %v278
  %v379 = vmul.f32 %v283, %v283
  %v380 = vmul.f32 %v286, %v286
  %v381 = vmul.f32 %v291, %v291
  %v382 = vmul.f32 %v294, %v294
  %v383 = vmul.f32 %v299, %v299
  %v384 = vmul.f32 %v302, %v302
  %v385 = vmul.f32 %v307, %v307
  %v386 = vmul.f32 %v310, %v310
  %v387 = vmul.f32 %v315, %v315
  %v388 = vmul.f32 %v318, %v318
  %v389 = vmul.f32 %v323, %v323
  %v390 = vmul.f32 %v326, %v326
  %v391 = vmul.f32 %v331, %v331
  %v392 = vmul.f32 %v334, %v334
  %v393 = vmul.f32 %v339, %v339
  %v394 = vmul.f32 %v342, %v342
  %v395 = vmul.f32 %v347, %v347
  %v396 = vmul.f32 %v350, %v350
  %v397 = vmul.f32 %v355, %v355
  %v398 = vmul.f32 %v358, %v358
  %v399 = vmul.f32 %v363, %v363
  %v400 = vmul.f32 %v366, %v366
  %v401 = vld [vmem:[%s2] sm:$0xff]
  %v402 = vld [vmem:[%s2 + $0x8] sm:$0xff]
  %v403 = vld [vmem:[%s2 + $0x10] sm:$0xff]
  %v404 = vld [vmem:[%s2 + $0x18] sm:$0xff]
  %v405 = vld [vmem:[%s2 + $0x20] sm:$0xff]
  %v406 = vld [vmem:[%s2 + $0x28] sm:$0xff]
  %v407 = vld [vmem:[%s2 + $0x30] sm:$0xff]
  %v408 = vld [vmem:[%s2 + $0x38] sm:$0xff]
  %v409 = vld [vmem:[%s2 + $0x40] sm:$0xff]
  %v410 = vld [vmem:[%s2 + $0x48] sm:$0xff]
  %v411 = vld [vmem:[%s2 + $0x50] sm:$0xff]
  %v412 = vld [vmem:[%s2 + $0x58] sm:$0xff]
  %v413 = vld [vmem:[%s2 + $0x60] sm:$0xff]
  %v414 = vld [vmem:[%s2 + $0x68] sm:$0xff]
  %v415 = vld [vmem:[%s2 + $0x70] sm:$0xff]
  %v416 = vld [vmem:[%s2 + $0x78] sm:$0xff]
  %417 = vmatprep.subr.mxu0 0.0
  %418 = vmatpush1.msra.mxu0 %v401
  %419 = vmatprep.subr.mxu0 0.0
  %420 = vmatpush1.msra.mxu0 %v402
  %421 = vmatprep.subr.mxu0 0.0
  %422 = vmatpush1.msra.mxu0 %v403
  %423 = vmatprep.subr.mxu0 0.0
  %424 = vmatpush1.msra.mxu0 %v404
  %425 = vmatprep.subr.mxu0 0.0
  %426 = vmatpush1.msra.mxu0 %v405
  %427 = vmatprep.subr.mxu0 0.0
  %428 = vmatpush1.msra.mxu0 %v406
  %429 = vmatprep.subr.mxu0 0.0
  %430 = vmatpush1.msra.mxu0 %v407
  %431 = vmatprep.subr.mxu0 0.0
  %432 = vmatpush1.msra.mxu0 %v408
  %433 = vmatprep.subr.mxu0 0.0
  %434 = vmatpush1.msra.mxu0 %v409
  %435 = vmatprep.subr.mxu0 0.0
  %436 = vmatpush1.msra.mxu0 %v410
  %437 = vmatprep.subr.mxu0 0.0
  %438 = vmatpush1.msra.mxu0 %v411
  %439 = vmatprep.subr.mxu0 0.0
  %440 = vmatpush1.msra.mxu0 %v412
  %441 = vmatprep.subr.mxu0 0.0
  %442 = vmatpush1.msra.mxu0 %v413
  %443 = vmatprep.subr.mxu0 0.0
  %444 = vmatpush1.msra.mxu0 %v414
  %445 = vmatprep.subr.mxu0 0.0
  %446 = vmatpush1.msra.mxu0 %v415
  %447 = vmatprep.subr.mxu0 0.0
  %448 = vmatpush1.msra.mxu0 %v416
  %449 = vmatprep.subr.mxu0 0.0
  %450 = vmatpush1.msra.mxu0 0.0
  %451 = vmatprep.subr.mxu0 0.0
  %452 = vmatpush1.msra.mxu0 0.0
  %453 = vmatprep.subr.mxu0 0.0
  %454 = vmatpush1.msra.mxu0 0.0
  %455 = vmatprep.subr.mxu0 0.0
  %456 = vmatpush1.msra.mxu0 0.0
  %457 = vmatprep.subr.mxu0 0.0
  %458 = vmatpush1.msra.mxu0 0.0
  %459 = vmatprep.subr.mxu0 0.0
  %460 = vmatpush1.msra.mxu0 0.0
  %461 = vmatprep.subr.mxu0 0.0
  %462 = vmatpush1.msra.mxu0 0.0
  %463 = vmatprep.subr.mxu0 0.0
  %464 = vmatpush1.msra.mxu0 0.0
  %465 = vmatprep.subr.mxu0 0.0
  %466 = vmatpush1.msra.mxu0 0.0
  %467 = vmatprep.subr.mxu0 0.0
  %468 = vmatpush1.msra.mxu0 0.0
  %469 = vmatprep.subr.mxu0 0.0
  %470 = vmatpush1.msra.mxu0 0.0
  %471 = vmatprep.subr.mxu0 0.0
  %472 = vmatpush1.msra.mxu0 0.0
  %473 = vmatprep.subr.mxu0 0.0
  %474 = vmatpush1.msra.mxu0 0.0
  %475 = vmatprep.subr.mxu0 0.0
  %476 = vmatpush1.msra.mxu0 0.0
  %477 = vmatprep.subr.mxu0 0.0
  %478 = vmatpush1.msra.mxu0 0.0
  %479 = vmatprep.subr.mxu0 0.0
  %480 = vmatpush1.msra.mxu0 0.0
  %481 = vmatprep.mubr.f32.mxu0 0.0
  %482 = vmatmul.mubr.f32.gmra.mrb[0].mxu0 %v369
  %v483 = vpop.f32.mrb[0].mxu0
  %v484 = vadd.f32 0.0, %v483
  %v485 = vpop.f32.mrb[0].mxu0
  %486 = vmatprep.mubr.f32.mxu0 0.0
  %487 = vmatmul.mubr.f32.gmra.mrb[0].mxu0 %v370
  %v488 = vpop.f32.mrb[0].mxu0
  %v489 = vadd.f32 0.0, %v488
  %v490 = vpop.f32.mrb[0].mxu0
  %491 = vmatprep.mubr.f32.mxu0 0.0
  %492 = vmatmul.mubr.f32.gmra.mrb[0].mxu0 %v371
  %v493 = vpop.f32.mrb[0].mxu0
  %v494 = vadd.f32 0.0, %v493
  %v495 = vpop.f32.mrb[0].mxu0
  %496 = vmatprep.mubr.f32.mxu0 0.0
  %497 = vmatmul.mubr.f32.gmra.mrb[0].mxu0 %v372
  %v498 = vpop.f32.mrb[0].mxu0
  %v499 = vadd.f32 0.0, %v498
  %v500 = vpop.f32.mrb[0].mxu0
  %501 = vmatprep.mubr.f32.mxu0 0.0
  %502 = vmatmul.mubr.f32.gmra.mrb[0].mxu0 %v373
  %v503 = vpop.f32.mrb[0].mxu0
  %v504 = vadd.f32 0.0, %v503
  %v505 = vpop.f32.mrb[0].mxu0
  %506 = vmatprep.mubr.f32.mxu0 0.0
  %507 = vmatmul.mubr.f32.gmra.mrb[0].mxu0 %v374
  %v508 = vpop.f32.mrb[0].mxu0
  %v509 = vadd.f32 0.0, %v508
  %v510 = vpop.f32.mrb[0].mxu0
  %511 = vmatprep.mubr.f32.mxu0 0.0
  %512 = vmatmul.mubr.f32.gmra.mrb[0].mxu0 %v375
  %v513 = vpop.f32.mrb[0].mxu0
  %v514 = vadd.f32 0.0, %v513
  %v515 = vpop.f32.mrb[0].mxu0
  %516 = vmatprep.mubr.f32.mxu0 0.0
  %517 = vmatmul.mubr.f32.gmra.mrb[0].mxu0 %v376
  %v518 = vpop.f32.mrb[0].mxu0
  %v519 = vadd.f32 0.0, %v518
  %v520 = vpop.f32.mrb[0].mxu0
  %521 = vmatprep.mubr.f32.mxu0 0.0
  %522 = vmatmul.mubr.f32.gmra.mrb[0].mxu0 %v377
  %v523 = vpop.f32.mrb[0].mxu0
  %v524 = vadd.f32 0.0, %v523
  %v525 = vpop.f32.mrb[0].mxu0
  %526 = vmatprep.mubr.f32.mxu0 0.0
  %527 = vmatmul.mubr.f32.gmra.mrb[0].mxu0 %v378
  %v528 = vpop.f32.mrb[0].mxu0
  %v529 = vadd.f32 0.0, %v528
  %v530 = vpop.f32.mrb[0].mxu0
  %531 = vmatprep.mubr.f32.mxu0 0.0
  %532 = vmatmul.mubr.f32.gmra.mrb[0].mxu0 %v379
  %v533 = vpop.f32.mrb[0].mxu0
  %v534 = vadd.f32 0.0, %v533
  %v535 = vpop.f32.mrb[0].mxu0
  %536 = vmatprep.mubr.f32.mxu0 0.0
  %537 = vmatmul.mubr.f32.gmra.mrb[0].mxu0 %v380
  %v538 = vpop.f32.mrb[0].mxu0
  %v539 = vadd.f32 0.0, %v538
  %v540 = vpop.f32.mrb[0].mxu0
  %541 = vmatprep.mubr.f32.mxu0 0.0
  %542 = vmatmul.mubr.f32.gmra.mrb[0].mxu0 %v381
  %v543 = vpop.f32.mrb[0].mxu0
  %v544 = vadd.f32 0.0, %v543
  %v545 = vpop.f32.mrb[0].mxu0
  %546 = vmatprep.mubr.f32.mxu0 0.0
  %547 = vmatmul.mubr.f32.gmra.mrb[0].mxu0 %v382
  %v548 = vpop.f32.mrb[0].mxu0
  %v549 = vadd.f32 0.0, %v548
  %v550 = vpop.f32.mrb[0].mxu0
  %551 = vmatprep.mubr.f32.mxu0 0.0
  %552 = vmatmul.mubr.f32.gmra.mrb[0].mxu0 %v383
  %v553 = vpop.f32.mrb[0].mxu0
  %v554 = vadd.f32 0.0, %v553
  %v555 = vpop.f32.mrb[0].mxu0
  %556 = vmatprep.mubr.f32.mxu0 0.0
  %557 = vmatmul.mubr.f32.gmra.mrb[0].mxu0 %v384
  %v558 = vpop.f32.mrb[0].mxu0
  %v559 = vadd.f32 0.0, %v558
  %v560 = vpop.f32.mrb[0].mxu0
  %561 = vmatprep.mubr.f32.mxu0 0.0
  %562 = vmatmul.mubr.f32.gmra.mrb[0].mxu0 %v385
  %v563 = vpop.f32.mrb[0].mxu0
  %v564 = vadd.f32 0.0, %v563
  %v565 = vpop.f32.mrb[0].mxu0
  %566 = vmatprep.mubr.f32.mxu0 0.0
  %567 = vmatmul.mubr.f32.gmra.mrb[0].mxu0 %v386
  %v568 = vpop.f32.mrb[0].mxu0
  %v569 = vadd.f32 0.0, %v568
  %v570 = vpop.f32.mrb[0].mxu0
  %571 = vmatprep.mubr.f32.mxu0 0.0
  %572 = vmatmul.mubr.f32.gmra.mrb[0].mxu0 %v387
  %v573 = vpop.f32.mrb[0].mxu0
  %v574 = vadd.f32 0.0, %v573
  %v575 = vpop.f32.mrb[0].mxu0
  %576 = vmatprep.mubr.f32.mxu0 0.0
  %577 = vmatmul.mubr.f32.gmra.mrb[0].mxu0 %v388
  %v578 = vpop.f32.mrb[0].mxu0
  %v579 = vadd.f32 0.0, %v578
  %v580 = vpop.f32.mrb[0].mxu0
  %581 = vmatprep.mubr.f32.mxu0 0.0
  %582 = vmatmul.mubr.f32.gmra.mrb[0].mxu0 %v389
  %v583 = vpop.f32.mrb[0].mxu0
  %v584 = vadd.f32 0.0, %v583
  %v585 = vpop.f32.mrb[0].mxu0
  %586 = vmatprep.mubr.f32.mxu0 0.0
  %587 = vmatmul.mubr.f32.gmra.mrb[0].mxu0 %v390
  %v588 = vpop.f32.mrb[0].mxu0
  %v589 = vadd.f32 0.0, %v588
  %v590 = vpop.f32.mrb[0].mxu0
  %591 = vmatprep.mubr.f32.mxu0 0.0
  %592 = vmatmul.mubr.f32.gmra.mrb[0].mxu0 %v391
  %v593 = vpop.f32.mrb[0].mxu0
  %v594 = vadd.f32 0.0, %v593
  %v595 = vpop.f32.mrb[0].mxu0
  %596 = vmatprep.mubr.f32.mxu0 0.0
  %597 = vmatmul.mubr.f32.gmra.mrb[0].mxu0 %v392
  %v598 = vpop.f32.mrb[0].mxu0
  %v599 = vadd.f32 0.0, %v598
  %v600 = vpop.f32.mrb[0].mxu0
  %601 = vmatprep.mubr.f32.mxu0 0.0
  %602 = vmatmul.mubr.f32.gmra.mrb[0].mxu0 %v393
  %v603 = vpop.f32.mrb[0].mxu0
  %v604 = vadd.f32 0.0, %v603
  %v605 = vpop.f32.mrb[0].mxu0
  %606 = vmatprep.mubr.f32.mxu0 0.0
  %607 = vmatmul.mubr.f32.gmra.mrb[0].mxu0 %v394
  %v608 = vpop.f32.mrb[0].mxu0
  %v609 = vadd.f32 0.0, %v608
  %v610 = vpop.f32.mrb[0].mxu0
  %611 = vmatprep.mubr.f32.mxu0 0.0
  %612 = vmatmul.mubr.f32.gmra.mrb[0].mxu0 %v395
  %v613 = vpop.f32.mrb[0].mxu0
  %v614 = vadd.f32 0.0, %v613
  %v615 = vpop.f32.mrb[0].mxu0
  %616 = vmatprep.mubr.f32.mxu0 0.0
  %617 = vmatmul.mubr.f32.gmra.mrb[0].mxu0 %v396
  %v618 = vpop.f32.mrb[0].mxu0
  %v619 = vadd.f32 0.0, %v618
  %v620 = vpop.f32.mrb[0].mxu0
  %621 = vmatprep.mubr.f32.mxu0 0.0
  %622 = vmatmul.mubr.f32.gmra.mrb[0].mxu0 %v397
  %v623 = vpop.f32.mrb[0].mxu0
  %v624 = vadd.f32 0.0, %v623
  %v625 = vpop.f32.mrb[0].mxu0
  %626 = vmatprep.mubr.f32.mxu0 0.0
  %627 = vmatmul.mubr.f32.gmra.mrb[0].mxu0 %v398
  %v628 = vpop.f32.mrb[0].mxu0
  %v629 = vadd.f32 0.0, %v628
  %v630 = vpop.f32.mrb[0].mxu0
  %631 = vmatprep.mubr.f32.mxu0 0.0
  %632 = vmatmul.mubr.f32.gmra.mrb[0].mxu0 %v399
  %v633 = vpop.f32.mrb[0].mxu0
  %v634 = vadd.f32 0.0, %v633
  %v635 = vpop.f32.mrb[0].mxu0
  %636 = vmatprep.mubr.f32.mxu0 0.0
  %637 = vmatmul.mubr.f32.gmra.mrb[0].mxu0 %v400
  %v638 = vpop.f32.mrb[0].mxu0
  %v639 = vadd.f32 0.0, %v638
  %v640 = vpop.f32.mrb[0].mxu0
  %641 = vdwg.mxu0
  %v642 = vmax.f32 %v484, 1e-10
  %v643 = vmax.f32 %v489, 1e-10
  %v644 = vmax.f32 %v494, 1e-10
  %v645 = vmax.f32 %v499, 1e-10
  %v646 = vmax.f32 %v504, 1e-10
  %v647 = vmax.f32 %v509, 1e-10
  %v648 = vmax.f32 %v514, 1e-10
  %v649 = vmax.f32 %v519, 1e-10
  %v650 = vmax.f32 %v524, 1e-10
  %v651 = vmax.f32 %v529, 1e-10
  %v652 = vmax.f32 %v534, 1e-10
  %v653 = vmax.f32 %v539, 1e-10
  %v654 = vmax.f32 %v544, 1e-10
  %v655 = vmax.f32 %v549, 1e-10
  %v656 = vmax.f32 %v554, 1e-10
  %v657 = vmax.f32 %v559, 1e-10
  %v658 = vmax.f32 %v564, 1e-10
  %v659 = vmax.f32 %v569, 1e-10
  %v660 = vmax.f32 %v574, 1e-10
  %v661 = vmax.f32 %v579, 1e-10
  %v662 = vmax.f32 %v584, 1e-10
  %v663 = vmax.f32 %v589, 1e-10
  %v664 = vmax.f32 %v594, 1e-10
  %v665 = vmax.f32 %v599, 1e-10
  %v666 = vmax.f32 %v604, 1e-10
  %v667 = vmax.f32 %v609, 1e-10
  %v668 = vmax.f32 %v614, 1e-10
  %v669 = vmax.f32 %v619, 1e-10
  %v670 = vmax.f32 %v624, 1e-10
  %v671 = vmax.f32 %v629, 1e-10
  %v672 = vmax.f32 %v634, 1e-10
  %v673 = vmax.f32 %v639, 1e-10
  %v674 = vlog2.pop %v642
  %v675 = vmul.f32 %v674, 0.6931472
  %v676 = vlog2.pop %v643
  %v677 = vmul.f32 %v676, 0.6931472
  %v678 = vlog2.pop %v644
  %v679 = vmul.f32 %v678, 0.6931472
  %v680 = vlog2.pop %v645
  %v681 = vmul.f32 %v680, 0.6931472
  %v682 = vlog2.pop %v646
  %v683 = vmul.f32 %v682, 0.6931472
  %v684 = vlog2.pop %v647
  %v685 = vmul.f32 %v684, 0.6931472
  %v686 = vlog2.pop %v648
  %v687 = vmul.f32 %v686, 0.6931472
  %v688 = vlog2.pop %v649
  %v689 = vmul.f32 %v688, 0.6931472
  %v690 = vlog2.pop %v650
  %v691 = vmul.f32 %v690, 0.6931472
  %v692 = vlog2.pop %v651
  %v693 = vmul.f32 %v692, 0.6931472
  %v694 = vlog2.pop %v652
  %v695 = vmul.f32 %v694, 0.6931472
  %v696 = vlog2.pop %v653
  %v697 = vmul.f32 %v696, 0.6931472
  %v698 = vlog2.pop %v654
  %v699 = vmul.f32 %v698, 0.6931472
  %v700 = vlog2.pop %v655
  %v701 = vmul.f32 %v700, 0.6931472
  %v702 = vlog2.pop %v656
  %v703 = vmul.f32 %v702, 0.6931472
  %v704 = vlog2.pop %v657
  %v705 = vmul.f32 %v704, 0.6931472
  %v706 = vlog2.pop %v658
  %v707 = vmul.f32 %v706, 0.6931472
  %v708 = vlog2.pop %v659
  %v709 = vmul.f32 %v708, 0.6931472
  %v710 = vlog2.pop %v660
  %v711 = vmul.f32 %v710, 0.6931472
  %v712 = vlog2.pop %v661
  %v713 = vmul.f32 %v712, 0.6931472
  %v714 = vlog2.pop %v662
  %v715 = vmul.f32 %v714, 0.6931472
  %v716 = vlog2.pop %v663
  %v717 = vmul.f32 %v716, 0.6931472
  %v718 = vlog2.pop %v664
  %v719 = vmul.f32 %v718, 0.6931472
  %v720 = vlog2.pop %v665
  %v721 = vmul.f32 %v720, 0.6931472
  %v722 = vlog2.pop %v666
  %v723 = vmul.f32 %v722, 0.6931472
  %v724 = vlog2.pop %v667
  %v725 = vmul.f32 %v724, 0.6931472
  %v726 = vlog2.pop %v668
  %v727 = vmul.f32 %v726, 0.6931472
  %v728 = vlog2.pop %v669
  %v729 = vmul.f32 %v728, 0.6931472
  %v730 = vlog2.pop %v670
  %v731 = vmul.f32 %v730, 0.6931472
  %v732 = vlog2.pop %v671
  %v733 = vmul.f32 %v732, 0.6931472
  %v734 = vlog2.pop %v672
  %v735 = vmul.f32 %v734, 0.6931472
  %v736 = vlog2.pop %v673
  %v737 = vmul.f32 %v736, 0.6931472
  %v738 = vmul.f32 %v675, 0.4342945
  %v739 = vmul.f32 %v677, 0.4342945
  %v740 = vmul.f32 %v679, 0.4342945
  %v741 = vmul.f32 %v681, 0.4342945
  %v742 = vmul.f32 %v683, 0.4342945
  %v743 = vmul.f32 %v685, 0.4342945
  %v744 = vmul.f32 %v687, 0.4342945
  %v745 = vmul.f32 %v689, 0.4342945
  %v746 = vmul.f32 %v691, 0.4342945
  %v747 = vmul.f32 %v693, 0.4342945
  %v748 = vmul.f32 %v695, 0.4342945
  %v749 = vmul.f32 %v697, 0.4342945
  %v750 = vmul.f32 %v699, 0.4342945
  %v751 = vmul.f32 %v701, 0.4342945
  %v752 = vmul.f32 %v703, 0.4342945
  %v753 = vmul.f32 %v705, 0.4342945
  %v754 = vmul.f32 %v707, 0.4342945
  %v755 = vmul.f32 %v709, 0.4342945
  %v756 = vmul.f32 %v711, 0.4342945
  %v757 = vmul.f32 %v713, 0.4342945
  %v758 = vmul.f32 %v715, 0.4342945
  %v759 = vmul.f32 %v717, 0.4342945
  %v760 = vmul.f32 %v719, 0.4342945
  %v761 = vmul.f32 %v721, 0.4342945
  %v762 = vmul.f32 %v723, 0.4342945
  %v763 = vmul.f32 %v725, 0.4342945
  %v764 = vmul.f32 %v727, 0.4342945
  %v765 = vmul.f32 %v729, 0.4342945
  %v766 = vmul.f32 %v731, 0.4342945
  %v767 = vmul.f32 %v733, 0.4342945
  %v768 = vmul.f32 %v735, 0.4342945
  %v769 = vmul.f32 %v737, 0.4342945
  %v770 = vmul.f32 %v738, 10.0
  %v771 = vmul.f32 %v739, 10.0
  %v772 = vmul.f32 %v740, 10.0
  %v773 = vmul.f32 %v741, 10.0
  %v774 = vmul.f32 %v742, 10.0
  %v775 = vmul.f32 %v743, 10.0
  %v776 = vmul.f32 %v744, 10.0
  %v777 = vmul.f32 %v745, 10.0
  %v778 = vmul.f32 %v746, 10.0
  %v779 = vmul.f32 %v747, 10.0
  %v780 = vmul.f32 %v748, 10.0
  %v781 = vmul.f32 %v749, 10.0
  %v782 = vmul.f32 %v750, 10.0
  %v783 = vmul.f32 %v751, 10.0
  %v784 = vmul.f32 %v752, 10.0
  %v785 = vmul.f32 %v753, 10.0
  %v786 = vmul.f32 %v754, 10.0
  %v787 = vmul.f32 %v755, 10.0
  %v788 = vmul.f32 %v756, 10.0
  %v789 = vmul.f32 %v757, 10.0
  %v790 = vmul.f32 %v758, 10.0
  %v791 = vmul.f32 %v759, 10.0
  %v792 = vmul.f32 %v760, 10.0
  %v793 = vmul.f32 %v761, 10.0
  %v794 = vmul.f32 %v762, 10.0
  %v795 = vmul.f32 %v763, 10.0
  %v796 = vmul.f32 %v764, 10.0
  %v797 = vmul.f32 %v765, 10.0
  %v798 = vmul.f32 %v766, 10.0
  %v799 = vmul.f32 %v767, 10.0
  %v800 = vmul.f32 %v768, 10.0
  %v801 = vmul.f32 %v769, 10.0
  %802 = vst [vmem:[%s3] sm:$0xff] %v770
  %803 = vst [vmem:[%s3 + $0x8] sm:$0xff] %v771
  %804 = vst [vmem:[%s3 + $0x10] sm:$0xff] %v772
  %805 = vst [vmem:[%s3 + $0x18] sm:$0xff] %v773
  %806 = vst [vmem:[%s3 + $0x20] sm:$0xff] %v774
  %807 = vst [vmem:[%s3 + $0x28] sm:$0xff] %v775
  %808 = vst [vmem:[%s3 + $0x30] sm:$0xff] %v776
  %809 = vst [vmem:[%s3 + $0x38] sm:$0xff] %v777
  %810 = vst [vmem:[%s3 + $0x40] sm:$0xff] %v778
  %811 = vst [vmem:[%s3 + $0x48] sm:$0xff] %v779
  %812 = vst [vmem:[%s3 + $0x50] sm:$0xff] %v780
  %813 = vst [vmem:[%s3 + $0x58] sm:$0xff] %v781
  %814 = vst [vmem:[%s3 + $0x60] sm:$0xff] %v782
  %815 = vst [vmem:[%s3 + $0x68] sm:$0xff] %v783
  %816 = vst [vmem:[%s3 + $0x70] sm:$0xff] %v784
  %817 = vst [vmem:[%s3 + $0x78] sm:$0xff] %v785
  %818 = vst [vmem:[%s3 + $0x80] sm:$0xff] %v786
  %819 = vst [vmem:[%s3 + $0x88] sm:$0xff] %v787
  %820 = vst [vmem:[%s3 + $0x90] sm:$0xff] %v788
  %821 = vst [vmem:[%s3 + $0x98] sm:$0xff] %v789
  %822 = vst [vmem:[%s3 + $0xa0] sm:$0xff] %v790
  %823 = vst [vmem:[%s3 + $0xa8] sm:$0xff] %v791
  %824 = vst [vmem:[%s3 + $0xb0] sm:$0xff] %v792
  %825 = vst [vmem:[%s3 + $0xb8] sm:$0xff] %v793
  %826 = vst [vmem:[%s3 + $0xc0] sm:$0xff] %v794
  %827 = vst [vmem:[%s3 + $0xc8] sm:$0xff] %v795
  %828 = vst [vmem:[%s3 + $0xd0] sm:$0xff] %v796
  %829 = vst [vmem:[%s3 + $0xd8] sm:$0xff] %v797
  %830 = vst [vmem:[%s3 + $0xe0] sm:$0xff] %v798
  %831 = vst [vmem:[%s3 + $0xe8] sm:$0xff] %v799
  %832 = vst [vmem:[%s3 + $0xf0] sm:$0xff] %v800
  %833 = vst [vmem:[%s3 + $0xf8] sm:$0xff] %v801
  // Predicated region
  $region14: #{_forward_impl.1} parent=0 // pred_check
    _
  $region15: #{_forward_impl.1} parent=0 // pred_check_branch
    %835 = sbr.rel (0) target = $region17
  $region16: #{_forward_impl.1} parent=0 // pred_region
    _
  $region17: #{_forward_impl.1} parent=0 // pred_fallthru
    _
  // Predicated region
  $region18: #{_forward_impl.1} parent=0 // pred_check
    _
  $region19: #{_forward_impl.1} parent=0 // pred_check_branch
    %837 = sbr.rel (0) target = $region21
  $region20: #{_forward_impl.1} parent=0 // pred_region
    _
  $region21: #{_forward_impl.1} parent=0 // pred_fallthru
    _

</llo_original>
